<compile_context>
chip_gen: v5e
topology: v5e:2x2
jax: 0.10.0
libtpu: 0.0.40
codegen_flags: <defaults>
</compile_context>

<pallas_src>
import math

import jax
import jax.numpy as jnp
from jax.experimental import pallas as pl
from jax.experimental.pallas import tpu as pltpu


def _broadcast_row_kernel(pe_ref, o_ref):
    # pe_ref: (1, 1, S*D) VMEM-resident positional-encoding row (same block
    #         every grid step, so it is fetched from HBM only once).
    # o_ref:  (1, 1, S*D) output row for the current batch index.
    o_ref[...] = pe_ref[...]


def make_position_table(d_model, max_len=1000, dtype=jnp.float32):
    """Mirrors PositionEncoding.__init__ (the precomputed buffer)."""
    position = jnp.arange(max_len, dtype=jnp.float32)[:, None]            # (max_len, 1)
    div_term = jnp.exp(jnp.arange(0, d_model, 2, dtype=jnp.float32)
                       * (-math.log(10000.0) / d_model))                  # (d_model//2,)
    angles = position * div_term                                          # (max_len, d_model//2)
    # Interleave so even columns hold sin and odd columns hold cos.
    pe = jnp.stack([jnp.sin(angles), jnp.cos(angles)], axis=-1)
    return pe.reshape(max_len, d_model).astype(dtype)


def position_encoding_forward(position_emb, batch, seq_len):
    """JAX/Pallas equivalent of PositionEncoding.forward."""
    max_len, d_model = position_emb.shape
    assert seq_len <= max_len, "sequence longer than max_len"
    flat = seq_len * d_model

    # `[:inputs.size(1)]` slice, flattened so the kernel sees one lane-dense
    # row per batch element (reshape back outside the kernel is free).
    pe_row = position_emb[:seq_len].reshape(1, 1, flat)

    out_flat = pl.pallas_call(
        _broadcast_row_kernel,
        out_shape=jax.ShapeDtypeStruct((batch, 1, flat), position_emb.dtype),
        grid=(batch,),
        in_specs=[pl.BlockSpec((1, 1, flat), lambda b: (0, 0, 0))],
        out_specs=pl.BlockSpec((1, 1, flat), lambda b: (b, 0, 0)),
        compiler_params=pltpu.CompilerParams(
            dimension_semantics=("parallel",)),
    )(pe_row)
    return out_flat.reshape(batch, seq_len, d_model)


class PositionEncoding:
    """Drop-in JAX equivalent of the PyTorch module."""

    def __init__(self, d_model, max_len=1000, dtype=jnp.float32):
        self.d_model = d_model
        self.max_len = max_len
        self.position_emb = make_position_table(d_model, max_len, dtype)

    def __call__(self, inputs):
        batch, seq_len = inputs.shape[0], inputs.shape[1]
        return position_encoding_forward(self.position_emb, batch, seq_len)


if __name__ == "__main__":
    batch, seq_len, d_model = 2, 8, 32
    max_len = 1000

    rng = jax.random.PRNGKey(0)
    # `inputs` only contributes its batch / sequence dims, exactly like the
    # PyTorch forward (the values are never read).
    inputs = jax.random.normal(rng, (batch, seq_len, d_model), dtype=jnp.float32)

    module = PositionEncoding(d_model, max_len=max_len)
    out = module(inputs)
    jax.block_until_ready(out)

    assert out.shape == (batch, seq_len, d_model)

    # Reference: plain-JAX equivalent of the PyTorch forward.
    ref = jnp.broadcast_to(module.position_emb[:seq_len][None],
                           (batch, seq_len, d_model))
    assert jnp.allclose(out, ref, atol=1e-6)
    # Spot-check sinusoid values at position 0: sin(0)=0 (even cols), cos(0)=1 (odd cols).
    assert jnp.allclose(out[:, 0, 0::2], 0.0, atol=1e-6)
    assert jnp.allclose(out[:, 0, 1::2], 1.0, atol=1e-6)
    assert jnp.all(jnp.isfinite(out))
    print("KERNEL_OK")
</pallas_src>

<mosaic_0001>
module attributes {stable_mosaic.version = 11 : i64} {
  func.func @_broadcast_row_kernel(%arg0: i32, %arg1: memref<1x1x256xf32, #tpu.memory_space<vmem>>, %arg2: memref<1x1x256xf32, #tpu.memory_space<vmem>>) attributes {dimension_semantics = [#tpu.dimension_semantics<parallel>], iteration_bounds = array<i64: 2>, scalar_prefetch = 0 : i64, scratch_operands = 0 : i64, tpu.core_type = #tpu.core_type<tc>, window_params = [{pipeline_mode = #tpu.pipeline_mode<synchronous>, transform_indices = @transform_0, window_bounds = array<i64: 1, 1, 256>}, {transform_indices = @transform_1, window_bounds = array<i64: 1, 1, 256>}]} {
    %c0 = arith.constant 0 : index
    %c0_0 = arith.constant 0 : index
    %c0_1 = arith.constant 0 : index
    %0 = vector.load %arg1[%c0, %c0_0, %c0_1] : memref<1x1x256xf32, #tpu.memory_space<vmem>>, vector<1x1x256xf32>
    %c0_2 = arith.constant 0 : index
    %c0_3 = arith.constant 0 : index
    %c0_4 = arith.constant 0 : index
    %1 = vector.load %arg2[%c0_2, %c0_3, %c0_4] : memref<1x1x256xf32, #tpu.memory_space<vmem>>, vector<1x1x256xf32>
    tpu.vector_store %arg2[%c0_2, %c0_3, %c0_4], %0 {strides = array<i32>} : memref<1x1x256xf32, #tpu.memory_space<vmem>>, vector<1x1x256xf32>,
    return
  }
  func.func @transform_0(%arg0: i32) -> (i32, i32, i32) {
    %c0_i32 = arith.constant 0 : i32
    %c0_i32_0 = arith.constant 0 : i32
    %c0_i32_1 = arith.constant 0 : i32
    %c0_i32_2 = arith.constant 0 : i32
    return %c0_i32, %c0_i32_0, %c0_i32_1 : i32, i32, i32
  }
  func.func @transform_1(%arg0: i32) -> (i32, i32, i32) {
    %c0_i32 = arith.constant 0 : i32
    %c0_i32_0 = arith.constant 0 : i32
    %c0_i32_1 = arith.constant 0 : i32
    return %arg0, %c0_i32, %c0_i32_0 : i32, i32, i32
  }
}

</mosaic_0001>

<llo_original>
// kernel: tpu_custom_call.1
$region0: #{tpu_custom_call.1}
  #allocation0 [shape = 'u32[]', space=smem, size = 0x4, offset = 0x4, fixed_abs, tag = 'smem constant byte address 0x4 - core index']
  #allocation1 [shape = 'u32[72,128]{1,0:T(1,128)}', space=vmem, size = 0x9000, scoped, tag = 'internal scratch']
  %s0 = inlined_call_operand.hbm [shape: f32[1,1,256], index: 0, kind: input, shape index: {}]
  %s1 = inlined_call_operand.hbm [shape: f32[2,1,256], index: 1, kind: output, shape index: {}]
  %s2 = sld [smem:[#allocation0]]
  $region41: #{tpu_custom_call.1} parent=0
    _
  %s4 = ssub.s32 1, %s2
  %s5 = scalar_select 0, %s4, %s2
  $region1: #{tpu_custom_call.1} parent=0
    #allocation2 [shape = 'u8[1024]{0}', space=vmem, size = 0x400, scoped, tag = 'input window, operand 0, single buffered']
    #allocation3 [shape = 's32[2]{0}', space=sflag, size = 0x8, scoped, tag = 'scoped memory for tpu_custom_call.1']
    #allocation4 [shape = 's32[2]{0}', space=sflag, size = 0x8, scoped, tag = 'scoped memory for tpu_custom_call.1']
    #allocation5 [shape = 'u8[2048]{0}', space=vmem, size = 0x800, scoped, tag = 'output window, operand 0']
    %6 = vsyncpa [#allocation3], 0
    %7 = vsyncpa [#allocation4], 0
    %s8 = scalar_lea.sflag [#allocation4], 1
    %9 = vsyncpa %s8, 0
    loop: start=0, step=1, limit=4
    $region2: #{tpu_custom_call.1} parent=1 // loop_pre_header
      _
    $region3: #{tpu_custom_call.1} parent=1 // loop_header
      %s11 = sphi 0, %s15
      %p12 = scmp.ge.s32.totalorder %s11, 4
      %s19 = sphi 0, %s19
      %s21 = sphi 0, %s19
      %s22 = sphi 0, %s21
      %s36 = sphi 0, %s22
      %s42 = sphi 0, %s44
      %s45 = sphi 0, %s42
      %s46 = sphi 0, %s45
      %s62 = sphi 0, %s46
    $region4: #{tpu_custom_call.1} parent=1 // loop_header_branch
      %14 = sbr.rel (%p12) target = $region8
    $region5: #{tpu_custom_call.1} parent=1 // loop_body
      %s16 = ssub.s32 %s11, 1
      %s17 = ssub.s32 %s11, 2
      %s18 = sadd.s32 %s11, 1
      %s20 = sadd.s32 %s19, 1
      %p23 = scmp.eq.s32.totalorder %s11, 1
      %p24 = scmp.ne.s32.totalorder %s19, %s21
      %p25 = scmp.eq.s32.totalorder %s11, 0
      %p26 = por %p24, %p25
      %p27 = scmp.ne.s32.totalorder %s19, %s21
      %p28 = scmp.eq.s32.totalorder %s16, 1
      %p29 = por %p27, %p28
      %p30 = scmp.ne.s32.totalorder %s21, %s22
      %p31 = scmp.eq.s32.totalorder %s16, 0
      %p32 = por %p30, %p31
      %p33 = scmp.ne.s32.totalorder %s21, %s22
      %p34 = scmp.eq.s32.totalorder %s17, 1
      %p35 = por %p33, %p34
      %p37 = scmp.ne.s32.totalorder %s22, %s36
      %p38 = scmp.eq.s32.totalorder %s17, 0
      %p39 = por %p37, %p38
      %s40 = ssub.s32 %s11, %s18
      %p41 = scmp.eq.s32.totalorder %s40, 0
      %s43 = sadd.s32 %s42, 1
      %s44 = scalar_select %p41, %s42, %s43
      %p47 = pneg %p41
      %p48 = scmp.eq.s32.totalorder %s11, 1
      %p49 = por %p47, %p48
      %p50 = scmp.ne.s32.totalorder %s42, %s45
      %p51 = scmp.eq.s32.totalorder %s11, 0
      %p52 = por %p50, %p51
      %p53 = scmp.ne.s32.totalorder %s42, %s45
      %p54 = scmp.eq.s32.totalorder %s16, 1
      %p55 = por %p53, %p54
      %p56 = scmp.ne.s32.totalorder %s45, %s46
      %p57 = scmp.eq.s32.totalorder %s16, 0
      %p58 = por %p56, %p57
      %p59 = scmp.ne.s32.totalorder %s45, %s46
      %p60 = scmp.eq.s32.totalorder %s17, 1
      %p61 = por %p59, %p60
      %p63 = scmp.ne.s32.totalorder %s46, %s62
      %p64 = scmp.eq.s32.totalorder %s17, 0
      %p65 = por %p63, %p64
      %p66 = scmp.le.s32.totalorder 1, %s11
      %p67 = scmp.lt.s32.totalorder %s11, 3
      %p68 = pnand %p66, %p67
      %p69 = pneg %p68
      // Predicated region
      $region9: #{tpu_custom_call.1} parent=5 // pred_check
        _
      $region10: #{tpu_custom_call.1} parent=5 // pred_check_branch
        %71 = sbr.rel (%p68) target = $region12
      $region11: #{tpu_custom_call.1} parent=5 // pred_region
        %s72 = ssub.s32 %s11, 1
        // Predicated region
        $region13: #{tpu_custom_call.1} parent=11 // pred_check
          %p73 = pneg %p32
        $region14: #{tpu_custom_call.1} parent=11 // pred_check_branch
          %75 = sbr.rel (%p73) target = $region16
        $region15: #{tpu_custom_call.1} parent=11 // pred_region
          %77 = vsyncadd [#allocation3], 0
          %s79 = sshll.u32 %s0, 4
          %s80 = int_to_ptr.hbm [resolvable:$true] %s79
          %s81 = sshll.u32 [#allocation2], 4
          %s82 = int_to_ptr.vmem [resolvable:$true] %s81
          %84 = dma.hbm_to_vmem [thread:$0]  %s80, 32, %s82, [#allocation3]
        $region16: #{tpu_custom_call.1} parent=11 // pred_fallthru
          _
      $region12: #{tpu_custom_call.1} parent=5 // pred_fallthru
        _
      %p85 = scmp.lt.s32.totalorder %s11, 2
      // Predicated region
      $region17: #{tpu_custom_call.1} parent=5 // pred_check
        %p86 = pneg %p85
      $region18: #{tpu_custom_call.1} parent=5 // pred_check_branch
        %88 = sbr.rel (%p86) target = $region20
      $region19: #{tpu_custom_call.1} parent=5 // pred_region
        _
      $region20: #{tpu_custom_call.1} parent=5 // pred_fallthru
        _
      %p89 = scmp.le.s32.totalorder 1, %s11
      %p90 = scmp.lt.s32.totalorder %s11, 3
      %p91 = pnand %p89, %p90
      %p92 = pneg %p91
      // Predicated region
      $region21: #{tpu_custom_call.1} parent=5 // pred_check
        _
      $region22: #{tpu_custom_call.1} parent=5 // pred_check_branch
        %94 = sbr.rel (%p91) target = $region24
      $region23: #{tpu_custom_call.1} parent=5 // pred_region
        %s95 = ssub.s32 %s11, 1
        // Predicated region
        $region25: #{tpu_custom_call.1} parent=23 // pred_check
          %p96 = pneg %p32
        $region26: #{tpu_custom_call.1} parent=23 // pred_check_branch
          %98 = sbr.rel (%p96) target = $region28
        $region27: #{tpu_custom_call.1} parent=23 // pred_region
          %100 = dma.done [#allocation3], 32
        $region28: #{tpu_custom_call.1} parent=23 // pred_fallthru
          _
        %p101 = pneg %p32
        %p102 = pneg %p29
        %p103 = pneg %p58
        %p104 = pneg %p55
        %s105 = sand.u32 %s45, 1
        %s106 = scalar_lea.sflag [#allocation4], %s105
        %s107 = sand.u32 %s45, 1
        %s108 = smul.addr %s107, 2
        %s109 = scalar_lea.vmem [#allocation5], %s108
        %v110 = vld [vmem:[#allocation2] sm:$0x3]
        %v111 = vlaneseq
        %vm112 = vcmp.ge.s32.totalorder %v111, 0
        %vm113 = vcmp.lt.s32.totalorder %v111, 256
        %vm114 = vmand %vm112, %vm113
        %115 = vst.msk [vmem:[%s109] sm:$0x3] %vm114, %v110
        %s116 = sand.u32 %s45, 1
        %s117 = scalar_lea.sflag [#allocation4], %s116
        %s118 = sand.u32 %s45, 1
        %s119 = smul.addr %s118, 2
        %s120 = scalar_lea.vmem [#allocation5], %s119
        // Predicated region
        $region29: #{tpu_custom_call.1} parent=23 // pred_check
          %p121 = pneg %p55
        $region30: #{tpu_custom_call.1} parent=23 // pred_check_branch
          %123 = sbr.rel (%p121) target = $region32
        $region31: #{tpu_custom_call.1} parent=23 // pred_region
          %125 = vsyncadd %s117, 0
          %s126 = smul.addr %s16, 2
          %s127 = scalar_lea.hbm %s1, %s126
          %s129 = sshll.u32 %s120, 4
          %s130 = int_to_ptr.vmem [resolvable:$true] %s129
          %s131 = sshll.u32 %s127, 4
          %s132 = int_to_ptr.hbm [resolvable:$true] %s131
          %134 = dma.vmem_to_hbm [thread:$0]  %s130, 32, %s132, %s117
        $region32: #{tpu_custom_call.1} parent=23 // pred_fallthru
          _
      $region24: #{tpu_custom_call.1} parent=5 // pred_fallthru
        _
      %p135 = scmp.le.s32.totalorder 2, %s11
      // Predicated region
      $region33: #{tpu_custom_call.1} parent=5 // pred_check
        %p136 = pneg %p135
      $region34: #{tpu_custom_call.1} parent=5 // pred_check_branch
        %138 = sbr.rel (%p136) target = $region36
      $region35: #{tpu_custom_call.1} parent=5 // pred_region
        %s139 = ssub.s32 %s11, 2
        // Predicated region
        $region37: #{tpu_custom_call.1} parent=35 // pred_check
          %p140 = pneg %p61
        $region38: #{tpu_custom_call.1} parent=35 // pred_check_branch
          %142 = sbr.rel (%p140) target = $region40
        $region39: #{tpu_custom_call.1} parent=35 // pred_region
          %s143 = sand.u32 %s46, 1
          %s144 = scalar_lea.sflag [#allocation4], %s143
          %s145 = sand.u32 %s46, 1
          %s146 = smul.addr %s145, 2
          %s147 = scalar_lea.vmem [#allocation5], %s146
          %149 = dma.done %s144, 32
        $region40: #{tpu_custom_call.1} parent=35 // pred_fallthru
          _
      $region36: #{tpu_custom_call.1} parent=5 // pred_fallthru
        _
    $region6: #{tpu_custom_call.1} parent=1 // loop_footer
      %s15 = sadd.s32 1, %s11
    $region7: #{tpu_custom_call.1} parent=1 // loop_footer_branch
      %10 = sbr.rel target = $region3
    $region8: #{tpu_custom_call.1} parent=1 // loop_exit
      _
    %150 = vsyncpa [#allocation3], 1
    %s151 = scalar_lea.sflag [#allocation3], 1
    %152 = vsyncpa %s151, 1
    %153 = vsyncpa [#allocation4], 1
    %s154 = scalar_lea.sflag [#allocation4], 1
    %155 = vsyncpa %s154, 1

</llo_original>
